<compile_context>
chip_gen: v7x
topology: tpu7x:2x2x1
jax: 0.10.0
libtpu: 0.0.40
codegen_flags: <defaults>
</compile_context>

<pallas_src>
import jax
import jax.numpy as jnp
from jax.experimental import pallas as pl
from jax.experimental.pallas import tpu as pltpu

_BF16 = 2
_F32 = 4


def _cdiv(a, b):
    return (a + b - 1) // b


def _round_up(n, m):
    return ((n + m - 1) // m) * m


# ---------------------------------------------------------------------------
# Kernels
# ---------------------------------------------------------------------------
def _gelu_exact(h):
    # Exact (erf-based) GELU in f32 — matches torch.nn.GELU() default.
    return 0.5 * h * (1.0 + jax.lax.erf(h * 0.7071067811865476))


def _mlp_kernel_resident(x_ref, w1_ref, b1_ref, w2_ref, b2_ref, o_ref):
    """grid = (row_tiles,). W1/W2 fully VMEM-resident (single hidden slab)."""
    h = jnp.dot(x_ref[...], w1_ref[...], preferred_element_type=jnp.float32)
    h = _gelu_exact(h + b1_ref[...])
    # TODO(synk): nn.Dropout(0.1) is identity in eval mode; training RNG masking not implemented.
    out = jnp.dot(h.astype(w2_ref.dtype), w2_ref[...],
                  preferred_element_type=jnp.float32)
    o_ref[...] = (out + b2_ref[...]).astype(o_ref.dtype)


def _mlp_kernel_streamed(x_ref, w1_ref, b1_ref, w2_ref, b2_ref, o_ref, acc_ref):
    """grid = (row_tiles, hidden_tiles); hidden (reduction) axis last."""
    k = pl.program_id(1)

    @pl.when(k == 0)
    def _():
        # Fold the second bias into the accumulator init (drops epilogue add).
        acc_ref[...] = jnp.broadcast_to(b2_ref[...], acc_ref.shape)

    h = jnp.dot(x_ref[...], w1_ref[...], preferred_element_type=jnp.float32)
    h = _gelu_exact(h + b1_ref[...])
    acc_ref[...] += jnp.dot(h.astype(w2_ref.dtype), w2_ref[...],
                            preferred_element_type=jnp.float32)

    @pl.when(k == pl.num_programs(1) - 1)
    def _():
        o_ref[...] = acc_ref[...].astype(o_ref.dtype)


# ---------------------------------------------------------------------------
# VMEM budgeting / tile selection
# ---------------------------------------------------------------------------
def _vmem_capacity_bytes():
    try:
        info = pltpu.get_tpu_info()
        cap = int(getattr(info, "vmem_capacity_bytes", 0))
        if cap > 0:
            return cap
    except Exception:
        pass
    return 64 * 1024 * 1024  # conservative (v7x-sized) fallback


def _resident_vmem_bytes(tm, dim_p, hidden_p, out_itemsize):
    dbl = 2  # BlockSpec double-buffers every pipelined block
    return (dbl * (tm * dim_p * _BF16                 # x tile (bf16)
                   + tm * dim_p * out_itemsize        # out tile
                   + dim_p * hidden_p * _BF16         # W1 (constant block)
                   + hidden_p * _F32                  # b1
                   + hidden_p * dim_p * _BF16         # W2 (constant block)
                   + dim_p * _F32)                    # b2
            + tm * hidden_p * _F32                    # h intermediate (f32)
            + tm * dim_p * _F32)                      # f32 result before cast


def _streamed_vmem_bytes(tm, th, dim_p, out_itemsize):
    dbl = 2
    return (dbl * (tm * dim_p * _BF16                 # x tile
                   + dim_p * th * _BF16               # W1 hidden-slab
                   + th * _F32                        # b1 hidden-slab
                   + th * dim_p * _BF16               # W2 hidden-slab
                   + dim_p * _F32                     # b2
                   + tm * dim_p * out_itemsize)       # out tile
            + tm * dim_p * _F32                       # f32 accumulator scratch
            + tm * th * _F32)                         # h intermediate


def _select_tiles(M, dim_p, hidden_p, out_itemsize, budget, tm_max):
    """Return (tm, th, resident)."""
    min_row_tiles = 2 if M >= 16 else 1  # >=2 row tiles: both v7x TensorCores busy

    def balanced_tm(cap):
        # Pick the smallest per-tile row count (multiple of 8) with tiles <= cap,
        # so the last tile is nearly full (minimal row-padding waste).
        n_tiles = max(min_row_tiles, _cdiv(M, cap))
        return _round_up(_cdiv(M, n_tiles), 8)

    # ---- resident-weights mode: th == hidden_p, single reduction step ------
    fixed = _resident_vmem_bytes(0, dim_p, hidden_p, out_itemsize)
    per_row = _resident_vmem_bytes(1, dim_p, hidden_p, out_itemsize) - fixed
    tm_cap = ((budget - fixed) // per_row) // 8 * 8 if budget > fixed else 0
    if tm_cap >= min(256, _round_up(max(M, 1), 8)):
        return balanced_tm(min(tm_cap, tm_max)), hidden_p, True

    # ---- streamed mode: weights stream over hidden in th-sized slabs -------
    tm = balanced_tm(tm_max)
    while True:
        th = hidden_p
        while th > 128 and _streamed_vmem_bytes(tm, th, dim_p, out_itemsize) > budget:
            th -= 128
            while hidden_p % th:
                th -= 128
        if _streamed_vmem_bytes(tm, th, dim_p, out_itemsize) <= budget or tm <= 64:
            return tm, th, False
        tm = max(64, _round_up(tm // 2, 8))


# ---------------------------------------------------------------------------
# Wrapper
# ---------------------------------------------------------------------------
def prepack_mlp_params(w1, b1, w2, b2):
    """One-time weight pad (lane-dense, (8,128)-friendly) + bf16 cast."""
    dim, hidden = w1.shape
    dim_p = _round_up(dim, 128)
    hidden_p = _round_up(hidden, 128)
    w1p = jnp.pad(w1, ((0, dim_p - dim), (0, hidden_p - hidden))).astype(jnp.bfloat16)
    w2p = jnp.pad(w2, ((0, hidden_p - hidden), (0, dim_p - dim))).astype(jnp.bfloat16)
    b1p = jnp.pad(b1, (0, hidden_p - hidden)).reshape(1, hidden_p).astype(jnp.float32)
    b2p = jnp.pad(b2, (0, dim_p - dim)).reshape(1, dim_p).astype(jnp.float32)
    return {"w1": w1p, "b1": b1p, "w2": w2p, "b2": b2p,
            "dim": dim, "hidden": hidden, "dim_p": dim_p, "hidden_p": hidden_p}


def mlp_forward(x, params, *, tm_max=1024, out_dtype=None, _budget_bytes=None):
    """x: (batch, seq, dim). params: output of prepack_mlp_params."""
    batch, seq, dim = x.shape
    assert dim == params["dim"], "x feature dim does not match packed params"
    dim_p, hidden_p = params["dim_p"], params["hidden_p"]
    M = batch * seq
    out_dtype = out_dtype or x.dtype
    out_itemsize = jnp.dtype(out_dtype).itemsize

    cap = _vmem_capacity_bytes()
    budget = _budget_bytes if _budget_bytes is not None else int(cap * 0.75)

    tm, th, resident = _select_tiles(M, dim_p, hidden_p, out_itemsize, budget, tm_max)
    M_p = _round_up(max(M, 1), tm)

    # Only x is padded / cast per call (weights were packed once).
    x2d = jnp.pad(x.reshape(M, dim), ((0, M_p - M), (0, dim_p - dim)))
    x2d = x2d.astype(jnp.bfloat16)

    footprint = (_resident_vmem_bytes(tm, dim_p, hidden_p, out_itemsize) if resident
                 else _streamed_vmem_bytes(tm, th, dim_p, out_itemsize))
    vmem_limit = min(max(int(footprint * 1.25) + (4 << 20), 32 << 20), cap)

    args = (x2d, params["w1"], params["b1"], params["w2"], params["b2"])

    if resident:
        out2d = pl.pallas_call(
            _mlp_kernel_resident,
            out_shape=jax.ShapeDtypeStruct((M_p, dim_p), out_dtype),
            grid_spec=pltpu.PrefetchScalarGridSpec(
                num_scalar_prefetch=0,
                grid=(M_p // tm,),
                in_specs=[
                    pl.BlockSpec((tm, dim_p), lambda i: (i, 0)),        # x rows
                    pl.BlockSpec((dim_p, hidden_p), lambda i: (0, 0)),  # W1 (resident)
                    pl.BlockSpec((1, hidden_p), lambda i: (0, 0)),      # b1
                    pl.BlockSpec((hidden_p, dim_p), lambda i: (0, 0)),  # W2 (resident)
                    pl.BlockSpec((1, dim_p), lambda i: (0, 0)),         # b2
                ],
                out_specs=pl.BlockSpec((tm, dim_p), lambda i: (i, 0)),
            ),
            compiler_params=pltpu.CompilerParams(
                dimension_semantics=("parallel",),
                vmem_limit_bytes=vmem_limit,
            ),
        )(*args)
    else:
        out2d = pl.pallas_call(
            _mlp_kernel_streamed,
            out_shape=jax.ShapeDtypeStruct((M_p, dim_p), out_dtype),
            grid_spec=pltpu.PrefetchScalarGridSpec(
                num_scalar_prefetch=0,
                grid=(M_p // tm, hidden_p // th),      # reduction (hidden) axis last
                in_specs=[
                    pl.BlockSpec((tm, dim_p), lambda i, k: (i, 0)),   # x rows tile
                    pl.BlockSpec((dim_p, th), lambda i, k: (0, k)),   # W1 hidden-slab
                    pl.BlockSpec((1, th), lambda i, k: (0, k)),       # b1 hidden-slab
                    pl.BlockSpec((th, dim_p), lambda i, k: (k, 0)),   # W2 hidden-slab
                    pl.BlockSpec((1, dim_p), lambda i, k: (0, 0)),    # b2
                ],
                out_specs=pl.BlockSpec((tm, dim_p), lambda i, k: (i, 0)),
                scratch_shapes=[pltpu.VMEM((tm, dim_p), jnp.float32)],
            ),
            compiler_params=pltpu.CompilerParams(
                dimension_semantics=("parallel", "arbitrary"),
                vmem_limit_bytes=vmem_limit,
            ),
        )(*args)

    return out2d[:M, :dim].reshape(batch, seq, dim)


# ---------------------------------------------------------------------------
# Params / reference / test
# ---------------------------------------------------------------------------
def init_params(key, dim):
    """Deterministic init mimicking torch.nn.Linear (uniform +/- 1/sqrt(fan_in))."""
    hidden = 4 * dim
    k1, k2, k3, k4 = jax.random.split(key, 4)
    lim1 = 1.0 / jnp.sqrt(dim)
    lim2 = 1.0 / jnp.sqrt(hidden)
    w1 = jax.random.uniform(k1, (dim, hidden), jnp.float32, -lim1, lim1)
    b1 = jax.random.uniform(k2, (hidden,), jnp.float32, -lim1, lim1)
    w2 = jax.random.uniform(k3, (hidden, dim), jnp.float32, -lim2, lim2)
    b2 = jax.random.uniform(k4, (dim,), jnp.float32, -lim2, lim2)
    return w1, b1, w2, b2


def _ref_mlp(x, w1, b1, w2, b2):
    """Plain-JAX reference using the same bf16 operand rounding as the kernel."""
    batch, seq, dim = x.shape
    f32 = jnp.float32
    xb = x.reshape(-1, dim).astype(jnp.bfloat16).astype(f32)
    w1b = w1.astype(jnp.bfloat16).astype(f32)
    w2b = w2.astype(jnp.bfloat16).astype(f32)
    h = xb @ w1b + b1
    h = 0.5 * h * (1.0 + jax.lax.erf(h * 0.7071067811865476))
    h = h.astype(jnp.bfloat16).astype(f32)
    return (h @ w2b + b2).reshape(batch, seq, dim)


if __name__ == "__main__":
    key = jax.random.PRNGKey(0)
    kx, kp, kx2, kp2 = jax.random.split(key, 4)

    # Small shape consistent with the module (dim=32 -> hidden=128); resident path.
    batch, seq, dim = 2, 8, 32
    x = jax.random.normal(kx, (batch, seq, dim), jnp.float32)
    w1, b1, w2, b2 = init_params(kp, dim)
    packed = prepack_mlp_params(w1, b1, w2, b2)
    out = mlp_forward(x, packed)
    jax.block_until_ready(out)
    ref = _ref_mlp(x, w1, b1, w2, b2)
    assert jnp.allclose(out, ref, atol=1e-2, rtol=1e-2), "mismatch vs reference (small)"

    # Larger shape: balanced row tiling (2 x 160-row tiles, zero row padding),
    # dim padding 192 -> 256, weights still fully resident.
    batch2, seq2, dim2 = 2, 160, 192
    x2 = jax.random.normal(kx2, (batch2, seq2, dim2), jnp.float32)
    p2 = init_params(kp2, dim2)
    packed2 = prepack_mlp_params(*p2)
    out2 = mlp_forward(x2, packed2)
    jax.block_until_ready(out2)
    ref2 = _ref_mlp(x2, *p2)
    assert jnp.allclose(out2, ref2, atol=1e-2, rtol=1e-2), "mismatch vs reference (tiled)"

    # Exercise the streamed (hidden-slab accumulator) fallback by forcing an
    # artificially small VMEM budget.
    out3 = mlp_forward(x2, packed2, _budget_bytes=1 << 20)
    jax.block_until_ready(out3)
    assert jnp.allclose(out3, ref2, atol=1e-2, rtol=1e-2), "mismatch vs reference (streamed)"

    print("KERNEL_OK")
</pallas_src>

<mosaic_0001>
module attributes {stable_mosaic.version = 11 : i64} {
  func.func @_mlp_kernel_resident(%arg0: i32, %arg1: memref<8x128xbf16, #tpu.memory_space<vmem>>, %arg2: memref<128x128xbf16, #tpu.memory_space<vmem>>, %arg3: memref<1x128xf32, #tpu.memory_space<vmem>>, %arg4: memref<128x128xbf16, #tpu.memory_space<vmem>>, %arg5: memref<1x128xf32, #tpu.memory_space<vmem>>, %arg6: memref<8x128xf32, #tpu.memory_space<vmem>>) attributes {dimension_semantics = [#tpu.dimension_semantics<parallel>], iteration_bounds = array<i64: 2>, scalar_prefetch = 0 : i64, scratch_operands = 0 : i64, tpu.core_type = #tpu.core_type<tc>, window_params = [{transform_indices = @transform_0, window_bounds = array<i64: 8, 128>}, {pipeline_mode = #tpu.pipeline_mode<synchronous>, transform_indices = @transform_1, window_bounds = array<i64: 128, 128>}, {pipeline_mode = #tpu.pipeline_mode<synchronous>, transform_indices = @transform_2, window_bounds = array<i64: 1, 128>}, {pipeline_mode = #tpu.pipeline_mode<synchronous>, transform_indices = @transform_3, window_bounds = array<i64: 128, 128>}, {pipeline_mode = #tpu.pipeline_mode<synchronous>, transform_indices = @transform_4, window_bounds = array<i64: 1, 128>}, {transform_indices = @transform_5, window_bounds = array<i64: 8, 128>}]} {
    %c0 = arith.constant 0 : index
    %c0_0 = arith.constant 0 : index
    %0 = vector.load %arg1[%c0, %c0_0] : memref<8x128xbf16, #tpu.memory_space<vmem>>, vector<8x128xbf16>
    %c0_1 = arith.constant 0 : index
    %c0_2 = arith.constant 0 : index
    %1 = vector.load %arg2[%c0_1, %c0_2] : memref<128x128xbf16, #tpu.memory_space<vmem>>, vector<128x128xbf16>
    %cst = arith.constant dense<0.000000e+00> : vector<8x128xf32>
    %2 = tpu.matmul %0, %1, %cst {dimension_numbers = #tpu.dot_dimension_numbers<[1], [0], [0], [1], [0, 0, 1, 1], [], []>} : vector<8x128xbf16>, vector<128x128xbf16>, vector<8x128xf32> -> vector<8x128xf32>
    %c0_3 = arith.constant 0 : index
    %c0_4 = arith.constant 0 : index
    %3 = vector.load %arg3[%c0_3, %c0_4] : memref<1x128xf32, #tpu.memory_space<vmem>>, vector<1x128xf32>
    %4 = vector.broadcast %3 : vector<1x128xf32> to vector<8x128xf32>
    %5 = arith.addf %2, %4 : vector<8x128xf32>
    %cst_5 = arith.constant 5.000000e-01 : f32
    %6 = vector.broadcast %cst_5 : f32 to vector<8x128xf32>
    %7 = arith.mulf %6, %5 : vector<8x128xf32>
    %cst_6 = arith.constant 0.707106769 : f32
    %8 = vector.broadcast %cst_6 : f32 to vector<8x128xf32>
    %9 = arith.mulf %5, %8 : vector<8x128xf32>
    %10 = math.erf %9 : vector<8x128xf32>
    %cst_7 = arith.constant 1.000000e+00 : f32
    %11 = vector.broadcast %cst_7 : f32 to vector<8x128xf32>
    %12 = arith.addf %11, %10 : vector<8x128xf32>
    %13 = arith.mulf %7, %12 : vector<8x128xf32>
    %14 = arith.truncf %13 : vector<8x128xf32> to vector<8x128xbf16>
    %c0_8 = arith.constant 0 : index
    %c0_9 = arith.constant 0 : index
    %15 = vector.load %arg4[%c0_8, %c0_9] : memref<128x128xbf16, #tpu.memory_space<vmem>>, vector<128x128xbf16>
    %cst_10 = arith.constant dense<0.000000e+00> : vector<8x128xf32>
    %16 = tpu.matmul %14, %15, %cst_10 {dimension_numbers = #tpu.dot_dimension_numbers<[1], [0], [0], [1], [0, 0, 1, 1], [], []>} : vector<8x128xbf16>, vector<128x128xbf16>, vector<8x128xf32> -> vector<8x128xf32>
    %c0_11 = arith.constant 0 : index
    %c0_12 = arith.constant 0 : index
    %17 = vector.load %arg5[%c0_11, %c0_12] : memref<1x128xf32, #tpu.memory_space<vmem>>, vector<1x128xf32>
    %18 = vector.broadcast %17 : vector<1x128xf32> to vector<8x128xf32>
    %19 = arith.addf %16, %18 : vector<8x128xf32>
    %c0_13 = arith.constant 0 : index
    %c0_14 = arith.constant 0 : index
    %20 = vector.load %arg6[%c0_13, %c0_14] : memref<8x128xf32, #tpu.memory_space<vmem>>, vector<8x128xf32>
    tpu.vector_store %arg6[%c0_13, %c0_14], %19 {strides = array<i32>} : memref<8x128xf32, #tpu.memory_space<vmem>>, vector<8x128xf32>,
    return
  }
  func.func @transform_0(%arg0: i32) -> (i32, i32) {
    %c0_i32 = arith.constant 0 : i32
    %c0_i32_0 = arith.constant 0 : i32
    return %arg0, %c0_i32 : i32, i32
  }
  func.func @transform_1(%arg0: i32) -> (i32, i32) {
    %c0_i32 = arith.constant 0 : i32
    %c0_i32_0 = arith.constant 0 : i32
    %c0_i32_1 = arith.constant 0 : i32
    return %c0_i32, %c0_i32_0 : i32, i32
  }
  func.func @transform_2(%arg0: i32) -> (i32, i32) {
    %c0_i32 = arith.constant 0 : i32
    %c0_i32_0 = arith.constant 0 : i32
    %c0_i32_1 = arith.constant 0 : i32
    return %c0_i32, %c0_i32_0 : i32, i32
  }
  func.func @transform_3(%arg0: i32) -> (i32, i32) {
    %c0_i32 = arith.constant 0 : i32
    %c0_i32_0 = arith.constant 0 : i32
    %c0_i32_1 = arith.constant 0 : i32
    return %c0_i32, %c0_i32_0 : i32, i32
  }
  func.func @transform_4(%arg0: i32) -> (i32, i32) {
    %c0_i32 = arith.constant 0 : i32
    %c0_i32_0 = arith.constant 0 : i32
    %c0_i32_1 = arith.constant 0 : i32
    return %c0_i32, %c0_i32_0 : i32, i32
  }
  func.func @transform_5(%arg0: i32) -> (i32, i32) {
    %c0_i32 = arith.constant 0 : i32
    %c0_i32_0 = arith.constant 0 : i32
    return %arg0, %c0_i32 : i32, i32
  }
}

</mosaic_0001>

<llo_original>
// kernel: tpu_custom_call.1
$region0: #{tpu_custom_call.1}
  #allocation0 [shape = 'u32[]', space=smem, size = 0x4, offset = 0x4, fixed_abs, tag = 'smem constant byte address 0x4 - core index']
  #allocation1 [shape = 'u32[144,128]{1,0:T(1,128)}', space=vmem, size = 0x12000, scoped, tag = 'internal scratch']
  %s0 = inlined_call_operand.hbm [shape: bf16[16,128], index: 0, kind: input, shape index: {}]
  %s1 = inlined_call_operand.hbm [shape: bf16[128,128], index: 1, kind: input, shape index: {}]
  %s2 = inlined_call_operand.vmem [shape: f32[1,128], index: 2, kind: input, shape index: {}]
  %s3 = inlined_call_operand.hbm [shape: bf16[128,128], index: 3, kind: input, shape index: {}]
  %s4 = inlined_call_operand.vmem [shape: f32[1,128], index: 4, kind: input, shape index: {}]
  %s5 = inlined_call_operand.hbm [shape: f32[16,128], index: 5, kind: output, shape index: {}]
  %s6 = sld [smem:[#allocation0]]
  $region65: #{tpu_custom_call.1} parent=0
    _
  %s8 = ssub.s32 1, %s6
  %s9 = scalar_select 0, %s8, %s6
  $region1: #{tpu_custom_call.1} parent=0
    #allocation2 [shape = 'u8[4096]{0}', space=vmem, size = 0x1000, scoped, tag = 'input window, operand 0']
    #allocation3 [shape = 's32[2]{0}', space=sflag, size = 0x8, scoped, tag = 'scoped memory for tpu_custom_call.1']
    #allocation4 [shape = 's32[2]{0}', space=sflag, size = 0x8, scoped, tag = 'scoped memory for tpu_custom_call.1']
    #allocation5 [shape = 'u8[32768]{0}', space=vmem, size = 0x8000, scoped, tag = 'input window, operand 1, single buffered']
    #allocation6 [shape = 's32[1]{0}', space=sflag, size = 0x4, scoped, tag = 'scoped memory for tpu_custom_call.1']
    #allocation7 [shape = 'u8[32768]{0}', space=vmem, size = 0x8000, scoped, tag = 'input window, operand 3, single buffered']
    #allocation8 [shape = 'u8[8192]{0}', space=vmem, size = 0x2000, scoped, tag = 'output window, operand 0']
    %10 = vsyncpa [#allocation3], 0
    %s11 = scalar_lea.sflag [#allocation3], 1
    %12 = vsyncpa %s11, 0
    %13 = vsyncpa [#allocation6], 0
    %14 = vsyncpa [#allocation4], 0
    %s15 = scalar_lea.sflag [#allocation4], 1
    %16 = vsyncpa %s15, 0
    loop: start=0, step=1, limit=4
    $region2: #{tpu_custom_call.1} parent=1 // loop_pre_header
      _
    $region3: #{tpu_custom_call.1} parent=1 // loop_header
      %s18 = sphi 0, %s22
      %p19 = scmp.ge.s32.totalorder %s18, 4
      %s28 = sphi 0, %s30
      %s31 = sphi 0, %s28
      %s32 = sphi 0, %s31
      %s48 = sphi 0, %s32
      %s52 = sphi 0, %s52
      %s54 = sphi 0, %s52
      %s55 = sphi 0, %s54
      %s69 = sphi 0, %s55
      %s73 = sphi 0, %s73
      %s75 = sphi 0, %s73
      %s76 = sphi 0, %s75
      %s90 = sphi 0, %s76
      %s94 = sphi 0, %s94
      %s96 = sphi 0, %s94
      %s97 = sphi 0, %s96
      %s111 = sphi 0, %s97
      %s115 = sphi 0, %s115
      %s117 = sphi 0, %s115
      %s118 = sphi 0, %s117
      %s132 = sphi 0, %s118
      %s138 = sphi 0, %s140
      %s141 = sphi 0, %s138
      %s142 = sphi 0, %s141
      %s158 = sphi 0, %s142
    $region4: #{tpu_custom_call.1} parent=1 // loop_header_branch
      %21 = sbr.rel (%p19) target = $region8
    $region5: #{tpu_custom_call.1} parent=1 // loop_body
      %s23 = ssub.s32 %s18, 1
      %s24 = ssub.s32 %s18, 2
      %s25 = sadd.s32 %s18, 1
      %s26 = ssub.s32 %s18, %s25
      %p27 = scmp.eq.s32.totalorder %s26, 0
      %s29 = sadd.s32 %s28, 1
      %s30 = scalar_select %p27, %s28, %s29
      %p33 = pneg %p27
      %p34 = scmp.eq.s32.totalorder %s18, 1
      %p35 = por %p33, %p34
      %p36 = scmp.ne.s32.totalorder %s28, %s31
      %p37 = scmp.eq.s32.totalorder %s18, 0
      %p38 = por %p36, %p37
      %p39 = scmp.ne.s32.totalorder %s28, %s31
      %p40 = scmp.eq.s32.totalorder %s23, 1
      %p41 = por %p39, %p40
      %p42 = scmp.ne.s32.totalorder %s31, %s32
      %p43 = scmp.eq.s32.totalorder %s23, 0
      %p44 = por %p42, %p43
      %p45 = scmp.ne.s32.totalorder %s31, %s32
      %p46 = scmp.eq.s32.totalorder %s24, 1
      %p47 = por %p45, %p46
      %p49 = scmp.ne.s32.totalorder %s32, %s48
      %p50 = scmp.eq.s32.totalorder %s24, 0
      %p51 = por %p49, %p50
      %s53 = sadd.s32 %s52, 1
      %p56 = scmp.eq.s32.totalorder %s18, 1
      %p57 = scmp.ne.s32.totalorder %s52, %s54
      %p58 = scmp.eq.s32.totalorder %s18, 0
      %p59 = por %p57, %p58
      %p60 = scmp.ne.s32.totalorder %s52, %s54
      %p61 = scmp.eq.s32.totalorder %s23, 1
      %p62 = por %p60, %p61
      %p63 = scmp.ne.s32.totalorder %s54, %s55
      %p64 = scmp.eq.s32.totalorder %s23, 0
      %p65 = por %p63, %p64
      %p66 = scmp.ne.s32.totalorder %s54, %s55
      %p67 = scmp.eq.s32.totalorder %s24, 1
      %p68 = por %p66, %p67
      %p70 = scmp.ne.s32.totalorder %s55, %s69
      %p71 = scmp.eq.s32.totalorder %s24, 0
      %p72 = por %p70, %p71
      %s74 = sadd.s32 %s73, 1
      %p77 = scmp.eq.s32.totalorder %s18, 1
      %p78 = scmp.ne.s32.totalorder %s73, %s75
      %p79 = scmp.eq.s32.totalorder %s18, 0
      %p80 = por %p78, %p79
      %p81 = scmp.ne.s32.totalorder %s73, %s75
      %p82 = scmp.eq.s32.totalorder %s23, 1
      %p83 = por %p81, %p82
      %p84 = scmp.ne.s32.totalorder %s75, %s76
      %p85 = scmp.eq.s32.totalorder %s23, 0
      %p86 = por %p84, %p85
      %p87 = scmp.ne.s32.totalorder %s75, %s76
      %p88 = scmp.eq.s32.totalorder %s24, 1
      %p89 = por %p87, %p88
      %p91 = scmp.ne.s32.totalorder %s76, %s90
      %p92 = scmp.eq.s32.totalorder %s24, 0
      %p93 = por %p91, %p92
      %s95 = sadd.s32 %s94, 1
      %p98 = scmp.eq.s32.totalorder %s18, 1
      %p99 = scmp.ne.s32.totalorder %s94, %s96
      %p100 = scmp.eq.s32.totalorder %s18, 0
      %p101 = por %p99, %p100
      %p102 = scmp.ne.s32.totalorder %s94, %s96
      %p103 = scmp.eq.s32.totalorder %s23, 1
      %p104 = por %p102, %p103
      %p105 = scmp.ne.s32.totalorder %s96, %s97
      %p106 = scmp.eq.s32.totalorder %s23, 0
      %p107 = por %p105, %p106
      %p108 = scmp.ne.s32.totalorder %s96, %s97
      %p109 = scmp.eq.s32.totalorder %s24, 1
      %p110 = por %p108, %p109
      %p112 = scmp.ne.s32.totalorder %s97, %s111
      %p113 = scmp.eq.s32.totalorder %s24, 0
      %p114 = por %p112, %p113
      %s116 = sadd.s32 %s115, 1
      %p119 = scmp.eq.s32.totalorder %s18, 1
      %p120 = scmp.ne.s32.totalorder %s115, %s117
      %p121 = scmp.eq.s32.totalorder %s18, 0
      %p122 = por %p120, %p121
      %p123 = scmp.ne.s32.totalorder %s115, %s117
      %p124 = scmp.eq.s32.totalorder %s23, 1
      %p125 = por %p123, %p124
      %p126 = scmp.ne.s32.totalorder %s117, %s118
      %p127 = scmp.eq.s32.totalorder %s23, 0
      %p128 = por %p126, %p127
      %p129 = scmp.ne.s32.totalorder %s117, %s118
      %p130 = scmp.eq.s32.totalorder %s24, 1
      %p131 = por %p129, %p130
      %p133 = scmp.ne.s32.totalorder %s118, %s132
      %p134 = scmp.eq.s32.totalorder %s24, 0
      %p135 = por %p133, %p134
      %s136 = ssub.s32 %s18, %s25
      %p137 = scmp.eq.s32.totalorder %s136, 0
      %s139 = sadd.s32 %s138, 1
      %s140 = scalar_select %p137, %s138, %s139
      %p143 = pneg %p137
      %p144 = scmp.eq.s32.totalorder %s18, 1
      %p145 = por %p143, %p144
      %p146 = scmp.ne.s32.totalorder %s138, %s141
      %p147 = scmp.eq.s32.totalorder %s18, 0
      %p148 = por %p146, %p147
      %p149 = scmp.ne.s32.totalorder %s138, %s141
      %p150 = scmp.eq.s32.totalorder %s23, 1
      %p151 = por %p149, %p150
      %p152 = scmp.ne.s32.totalorder %s141, %s142
      %p153 = scmp.eq.s32.totalorder %s23, 0
      %p154 = por %p152, %p153
      %p155 = scmp.ne.s32.totalorder %s141, %s142
      %p156 = scmp.eq.s32.totalorder %s24, 1
      %p157 = por %p155, %p156
      %p159 = scmp.ne.s32.totalorder %s142, %s158
      %p160 = scmp.eq.s32.totalorder %s24, 0
      %p161 = por %p159, %p160
      %p162 = scmp.le.s32.totalorder 1, %s18
      %p163 = scmp.lt.s32.totalorder %s18, 3
      %p164 = pnand %p162, %p163
      %p165 = pneg %p164
      // Predicated region
      $region9: #{tpu_custom_call.1} parent=5 // pred_check
        _
      $region10: #{tpu_custom_call.1} parent=5 // pred_check_branch
        %167 = sbr.rel (%p164) target = $region12
      $region11: #{tpu_custom_call.1} parent=5 // pred_region
        %s168 = ssub.s32 %s18, 1
        // Predicated region
        $region13: #{tpu_custom_call.1} parent=11 // pred_check
          %p169 = pneg %p65
        $region14: #{tpu_custom_call.1} parent=11 // pred_check_branch
          %171 = sbr.rel (%p169) target = $region16
        $region15: #{tpu_custom_call.1} parent=11 // pred_region
          %s173 = ssub.s32 1024, 1024
          %174 = vsyncadd [#allocation6], %s173
          %s175 = sshll.u32 [#allocation5], 4
          %s176 = int_to_ptr.vmem [resolvable:$true] %s175
          %181 = dma.hbm_to_vmem [thread:$0]  %s1, 1024, %s176, [#allocation6], 64, 64, 4
        $region16: #{tpu_custom_call.1} parent=11 // pred_fallthru
          _
        // Predicated region
        $region17: #{tpu_custom_call.1} parent=11 // pred_check
          %p182 = pneg %p86
        $region18: #{tpu_custom_call.1} parent=11 // pred_check_branch
          %184 = sbr.rel (%p182) target = $region20
        $region19: #{tpu_custom_call.1} parent=11 // pred_region
          _
        $region20: #{tpu_custom_call.1} parent=11 // pred_fallthru
          _
        // Predicated region
        $region21: #{tpu_custom_call.1} parent=11 // pred_check
          %p185 = pneg %p107
        $region22: #{tpu_custom_call.1} parent=11 // pred_check_branch
          %187 = sbr.rel (%p185) target = $region24
        $region23: #{tpu_custom_call.1} parent=11 // pred_region
          %s189 = ssub.s32 1024, 1024
          %190 = vsyncadd [#allocation6], %s189
          %s191 = sshll.u32 [#allocation7], 4
          %s192 = int_to_ptr.vmem [resolvable:$true] %s191
          %197 = dma.hbm_to_vmem [thread:$0]  %s3, 1024, %s192, [#allocation6], 64, 64, 4
        $region24: #{tpu_custom_call.1} parent=11 // pred_fallthru
          _
        // Predicated region
        $region25: #{tpu_custom_call.1} parent=11 // pred_check
          %p198 = pneg %p128
        $region26: #{tpu_custom_call.1} parent=11 // pred_check_branch
          %200 = sbr.rel (%p198) target = $region28
        $region27: #{tpu_custom_call.1} parent=11 // pred_region
          _
        $region28: #{tpu_custom_call.1} parent=11 // pred_fallthru
          _
      $region12: #{tpu_custom_call.1} parent=5 // pred_fallthru
        _
      %p201 = scmp.lt.s32.totalorder %s18, 2
      // Predicated region
      $region29: #{tpu_custom_call.1} parent=5 // pred_check
        %p202 = pneg %p201
      $region30: #{tpu_custom_call.1} parent=5 // pred_check_branch
        %204 = sbr.rel (%p202) target = $region32
      $region31: #{tpu_custom_call.1} parent=5 // pred_region
        // Predicated region
        $region33: #{tpu_custom_call.1} parent=31 // pred_check
          %p205 = pneg %p38
        $region34: #{tpu_custom_call.1} parent=31 // pred_check_branch
          %207 = sbr.rel (%p205) target = $region36
        $region35: #{tpu_custom_call.1} parent=31 // pred_region
          %s208 = sand.u32 %s28, 1
          %s209 = scalar_lea.sflag [#allocation3], %s208
          %s210 = sand.u32 %s28, 1
          %s211 = smul.addr %s210, 4
          %s212 = scalar_lea.vmem [#allocation2], %s211
          %s214 = ssub.s32 64, 64
          %215 = vsyncadd %s209, %s214
          %s216 = smul.addr %s18, 64
          %s217 = scalar_lea.hbm %s0, %s216
          %s219 = sshll.u32 %s212, 4
          %s220 = int_to_ptr.vmem [resolvable:$true] %s219
          %222 = dma.hbm_to_vmem [thread:$0]  %s217, 64, %s220, %s209
        $region36: #{tpu_custom_call.1} parent=31 // pred_fallthru
          _
      $region32: #{tpu_custom_call.1} parent=5 // pred_fallthru
        _
      %p223 = scmp.le.s32.totalorder 1, %s18
      %p224 = scmp.lt.s32.totalorder %s18, 3
      %p225 = pnand %p223, %p224
      %p226 = pneg %p225
      // Predicated region
      $region37: #{tpu_custom_call.1} parent=5 // pred_check
        _
      $region38: #{tpu_custom_call.1} parent=5 // pred_check_branch
        %228 = sbr.rel (%p225) target = $region40
      $region39: #{tpu_custom_call.1} parent=5 // pred_region
        %s229 = ssub.s32 %s18, 1
        %s230 = sand.u32 %s31, 1
        %s231 = scalar_lea.sflag [#allocation3], %s230
        %s232 = sand.u32 %s31, 1
        %s233 = smul.addr %s232, 4
        %s234 = scalar_lea.vmem [#allocation2], %s233
        // Predicated region
        $region41: #{tpu_custom_call.1} parent=39 // pred_check
          %p235 = pneg %p44
        $region42: #{tpu_custom_call.1} parent=39 // pred_check_branch
          %237 = sbr.rel (%p235) target = $region44
        $region43: #{tpu_custom_call.1} parent=39 // pred_region
          %238 = dma.done %s231, 64
        $region44: #{tpu_custom_call.1} parent=39 // pred_fallthru
          _
        // Predicated region
        $region45: #{tpu_custom_call.1} parent=39 // pred_check
          %p239 = pneg %p65
        $region46: #{tpu_custom_call.1} parent=39 // pred_check_branch
          %241 = sbr.rel (%p239) target = $region48
        $region47: #{tpu_custom_call.1} parent=39 // pred_region
          %242 = dma.done [#allocation6], 1024
        $region48: #{tpu_custom_call.1} parent=39 // pred_fallthru
          _
        // Predicated region
        $region49: #{tpu_custom_call.1} parent=39 // pred_check
          %p243 = pneg %p107
        $region50: #{tpu_custom_call.1} parent=39 // pred_check_branch
          %245 = sbr.rel (%p243) target = $region52
        $region51: #{tpu_custom_call.1} parent=39 // pred_region
          %246 = dma.done [#allocation6], 1024
        $region52: #{tpu_custom_call.1} parent=39 // pred_fallthru
          _
        %s247 = sand.u32 %s31, 1
        %s248 = scalar_lea.sflag [#allocation3], %s247
        %s249 = sand.u32 %s31, 1
        %s250 = smul.addr %s249, 4
        %s251 = scalar_lea.vmem [#allocation2], %s250
        %p252 = pneg %p44
        %p253 = pneg %p41
        %p254 = pneg %p65
        %p255 = pneg %p62
        %p256 = pneg %p86
        %p257 = pneg %p83
        %p258 = pneg %p107
        %p259 = pneg %p104
        %p260 = pneg %p128
        %p261 = pneg %p125
        %p262 = pneg %p154
        %p263 = pneg %p151
        %s264 = sand.u32 %s141, 1
        %s265 = scalar_lea.sflag [#allocation4], %s264
        %s266 = sand.u32 %s141, 1
        %s267 = smul.addr %s266, 8
        %s268 = scalar_lea.vmem [#allocation8], %s267
        %v270 = vld [vmem:[%s234] sm:$0xf]
        %v271 = vld [vmem:[#allocation5] sm:$0xf]
        %v272 = vld [vmem:[#allocation5 + $0x4] sm:$0xf]
        %v273 = vld [vmem:[#allocation5 + $0x8] sm:$0xf]
        %v274 = vld [vmem:[#allocation5 + $0xc] sm:$0xf]
        %v275 = vld [vmem:[#allocation5 + $0x10] sm:$0xf]
        %v276 = vld [vmem:[#allocation5 + $0x14] sm:$0xf]
        %v277 = vld [vmem:[#allocation5 + $0x18] sm:$0xf]
        %v278 = vld [vmem:[#allocation5 + $0x1c] sm:$0xf]
        %v279 = vld [vmem:[#allocation5 + $0x20] sm:$0xf]
        %v280 = vld [vmem:[#allocation5 + $0x24] sm:$0xf]
        %v281 = vld [vmem:[#allocation5 + $0x28] sm:$0xf]
        %v282 = vld [vmem:[#allocation5 + $0x2c] sm:$0xf]
        %v283 = vld [vmem:[#allocation5 + $0x30] sm:$0xf]
        %v284 = vld [vmem:[#allocation5 + $0x34] sm:$0xf]
        %v285 = vld [vmem:[#allocation5 + $0x38] sm:$0xf]
        %v286 = vld [vmem:[#allocation5 + $0x3c] sm:$0xf]
        %v287 = vld [vmem:[%s2] sm:$0x1]
        %v289 = vlaneseq
        %v290 = vshrl.u32 %v289, 7
        %v291 = vsub.s32 0, %v290
        %v292 = vrot.slane %v287, %v291
        %v310 = vunpack.c.l.b16 %v271
        %v311 = vunpack.c.l.b16 %v272
        %v312 = vunpack.c.l.b16 %v273
        %v313 = vunpack.c.l.b16 %v274
        %v314 = vunpack.c.l.b16 %v275
        %v315 = vunpack.c.l.b16 %v276
        %v316 = vunpack.c.l.b16 %v277
        %v317 = vunpack.c.l.b16 %v278
        %v318 = vunpack.c.l.b16 %v279
        %v319 = vunpack.c.l.b16 %v280
        %v320 = vunpack.c.l.b16 %v281
        %v321 = vunpack.c.l.b16 %v282
        %v322 = vunpack.c.l.b16 %v283
        %v323 = vunpack.c.l.b16 %v284
        %v324 = vunpack.c.l.b16 %v285
        %v325 = vunpack.c.l.b16 %v286
        %v326 = vpack.c.b16 %v311, %v310
        %v327 = vpack.c.b16 %v313, %v312
        %v328 = vpack.c.b16 %v315, %v314
        %v329 = vpack.c.b16 %v317, %v316
        %v330 = vpack.c.b16 %v319, %v318
        %v331 = vpack.c.b16 %v321, %v320
        %v332 = vpack.c.b16 %v323, %v322
        %v333 = vpack.c.b16 %v325, %v324
        %342 = vmatprep.subr.bf16.mxu0 0
        %343 = vmatpush1.bf16.msra.mxu0 %v326
        %344 = vmatprep.subr.bf16.mxu0 0
        %345 = vmatpush1.bf16.msra.mxu0 %v327
        %346 = vmatprep.subr.bf16.mxu0 0
        %347 = vmatpush1.bf16.msra.mxu0 %v328
        %348 = vmatprep.subr.bf16.mxu0 0
        %349 = vmatpush1.bf16.msra.mxu0 %v329
        %350 = vmatprep.subr.bf16.mxu0 0
        %351 = vmatpush1.bf16.msra.mxu0 %v330
        %352 = vmatprep.subr.bf16.mxu0 0
        %353 = vmatpush1.bf16.msra.mxu0 %v331
        %354 = vmatprep.subr.bf16.mxu0 0
        %355 = vmatpush1.bf16.msra.mxu0 %v332
        %356 = vmatprep.subr.bf16.mxu0 0
        %357 = vmatpush1.bf16.msra.mxu0 %v333
        %358 = vmatprep.subr.bf16.mxu0 0
        %359 = vmatpush1.bf16.msra.mxu0 0
        %360 = vmatprep.subr.bf16.mxu0 0
        %361 = vmatpush1.bf16.msra.mxu0 0
        %362 = vmatprep.subr.bf16.mxu0 0
        %363 = vmatpush1.bf16.msra.mxu0 0
        %364 = vmatprep.subr.bf16.mxu0 0
        %365 = vmatpush1.bf16.msra.mxu0 0
        %366 = vmatprep.subr.bf16.mxu0 0
        %367 = vmatpush1.bf16.msra.mxu0 0
        %368 = vmatprep.subr.bf16.mxu0 0
        %369 = vmatpush1.bf16.msra.mxu0 0
        %370 = vmatprep.subr.bf16.mxu0 0
        %371 = vmatpush1.bf16.msra.mxu0 0
        %372 = vmatprep.subr.bf16.mxu0 0
        %373 = vmatpush1.bf16.msra.mxu0 0
        %374 = vmatprep.mubr.bf16.mxu0 0
        %375 = vmatmul.mubr.bf16.gmra.mrb[0].mxu0 %v270
        %v376 = vpop.f32.mrb[0].mxu0
        %v377 = vadd.f32 %v292, %v376
        %v378 = vpop.f32.mrb[0].mxu0
        %v379 = vpop.f32.mrb[0].mxu0
        %v380 = vpop.f32.mrb[0].mxu0
        %381 = vdwg.mxu0
        %v382 = vmul.f32 %v377, 0.5
        %v383 = vmul.f32 %v377, 0.70710677
        %v384 = verf.f32.pop %v383
        %v385 = vadd.f32 %v384, 1.0
        %v386 = vmul.f32 %v382, %v385
        %v387 = vpack.c.bf16 %v386, %v386
        %v388 = vld [vmem:[#allocation7] sm:$0xf]
        %v389 = vld [vmem:[#allocation7 + $0x4] sm:$0xf]
        %v390 = vld [vmem:[#allocation7 + $0x8] sm:$0xf]
        %v391 = vld [vmem:[#allocation7 + $0xc] sm:$0xf]
        %v392 = vld [vmem:[#allocation7 + $0x10] sm:$0xf]
        %v393 = vld [vmem:[#allocation7 + $0x14] sm:$0xf]
        %v394 = vld [vmem:[#allocation7 + $0x18] sm:$0xf]
        %v395 = vld [vmem:[#allocation7 + $0x1c] sm:$0xf]
        %v396 = vld [vmem:[#allocation7 + $0x20] sm:$0xf]
        %v397 = vld [vmem:[#allocation7 + $0x24] sm:$0xf]
        %v398 = vld [vmem:[#allocation7 + $0x28] sm:$0xf]
        %v399 = vld [vmem:[#allocation7 + $0x2c] sm:$0xf]
        %v400 = vld [vmem:[#allocation7 + $0x30] sm:$0xf]
        %v401 = vld [vmem:[#allocation7 + $0x34] sm:$0xf]
        %v402 = vld [vmem:[#allocation7 + $0x38] sm:$0xf]
        %v403 = vld [vmem:[#allocation7 + $0x3c] sm:$0xf]
        %v404 = vld [vmem:[%s4] sm:$0x1]
        %v406 = vlaneseq
        %v407 = vshrl.u32 %v406, 7
        %v408 = vsub.s32 0, %v407
        %v409 = vrot.slane %v404, %v408
        %v427 = vunpack.c.l.b16 %v388
        %v428 = vunpack.c.l.b16 %v389
        %v429 = vunpack.c.l.b16 %v390
        %v430 = vunpack.c.l.b16 %v391
        %v431 = vunpack.c.l.b16 %v392
        %v432 = vunpack.c.l.b16 %v393
        %v433 = vunpack.c.l.b16 %v394
        %v434 = vunpack.c.l.b16 %v395
        %v435 = vunpack.c.l.b16 %v396
        %v436 = vunpack.c.l.b16 %v397
        %v437 = vunpack.c.l.b16 %v398
        %v438 = vunpack.c.l.b16 %v399
        %v439 = vunpack.c.l.b16 %v400
        %v440 = vunpack.c.l.b16 %v401
        %v441 = vunpack.c.l.b16 %v402
        %v442 = vunpack.c.l.b16 %v403
        %v443 = vpack.c.b16 %v428, %v427
        %v444 = vpack.c.b16 %v430, %v429
        %v445 = vpack.c.b16 %v432, %v431
        %v446 = vpack.c.b16 %v434, %v433
        %v447 = vpack.c.b16 %v436, %v435
        %v448 = vpack.c.b16 %v438, %v437
        %v449 = vpack.c.b16 %v440, %v439
        %v450 = vpack.c.b16 %v442, %v441
        %459 = vmatprep.subr.bf16.mxu0 0
        %460 = vmatpush1.bf16.msra.mxu0 %v443
        %461 = vmatprep.subr.bf16.mxu0 0
        %462 = vmatpush1.bf16.msra.mxu0 %v444
        %463 = vmatprep.subr.bf16.mxu0 0
        %464 = vmatpush1.bf16.msra.mxu0 %v445
        %465 = vmatprep.subr.bf16.mxu0 0
        %466 = vmatpush1.bf16.msra.mxu0 %v446
        %467 = vmatprep.subr.bf16.mxu0 0
        %468 = vmatpush1.bf16.msra.mxu0 %v447
        %469 = vmatprep.subr.bf16.mxu0 0
        %470 = vmatpush1.bf16.msra.mxu0 %v448
        %471 = vmatprep.subr.bf16.mxu0 0
        %472 = vmatpush1.bf16.msra.mxu0 %v449
        %473 = vmatprep.subr.bf16.mxu0 0
        %474 = vmatpush1.bf16.msra.mxu0 %v450
        %475 = vmatprep.subr.bf16.mxu0 0
        %476 = vmatpush1.bf16.msra.mxu0 0
        %477 = vmatprep.subr.bf16.mxu0 0
        %478 = vmatpush1.bf16.msra.mxu0 0
        %479 = vmatprep.subr.bf16.mxu0 0
        %480 = vmatpush1.bf16.msra.mxu0 0
        %481 = vmatprep.subr.bf16.mxu0 0
        %482 = vmatpush1.bf16.msra.mxu0 0
        %483 = vmatprep.subr.bf16.mxu0 0
        %484 = vmatpush1.bf16.msra.mxu0 0
        %485 = vmatprep.subr.bf16.mxu0 0
        %486 = vmatpush1.bf16.msra.mxu0 0
        %487 = vmatprep.subr.bf16.mxu0 0
        %488 = vmatpush1.bf16.msra.mxu0 0
        %489 = vmatprep.subr.bf16.mxu0 0
        %490 = vmatpush1.bf16.msra.mxu0 0
        %491 = vmatprep.mubr.bf16.mxu0 0
        %492 = vmatmul.mubr.bf16.gmra.mrb[0].mxu0 %v387
        %v493 = vpop.f32.mrb[0].mxu0
        %v494 = vadd.f32 %v409, %v493
        %v495 = vpop.f32.mrb[0].mxu0
        %v496 = vpop.f32.mrb[0].mxu0
        %v497 = vpop.f32.mrb[0].mxu0
        %498 = vdwg.mxu0
        %499 = vst [vmem:[%s268] sm:$0xff] %v494
        %s500 = sand.u32 %s141, 1
        %s501 = scalar_lea.sflag [#allocation4], %s500
        %s502 = sand.u32 %s141, 1
        %s503 = smul.addr %s502, 8
        %s504 = scalar_lea.vmem [#allocation8], %s503
        // Predicated region
        $region53: #{tpu_custom_call.1} parent=39 // pred_check
          %p505 = pneg %p151
        $region54: #{tpu_custom_call.1} parent=39 // pred_check_branch
          %507 = sbr.rel (%p505) target = $region56
        $region55: #{tpu_custom_call.1} parent=39 // pred_region
          %s509 = ssub.s32 128, 128
          %510 = vsyncadd %s501, %s509
          %s511 = smul.addr %s23, 128
          %s512 = scalar_lea.hbm %s5, %s511
          %s514 = sshll.u32 %s504, 4
          %s515 = int_to_ptr.vmem [resolvable:$true] %s514
          %517 = dma.vmem_to_hbm [thread:$0]  %s515, 128, %s512, %s501
        $region56: #{tpu_custom_call.1} parent=39 // pred_fallthru
          _
      $region40: #{tpu_custom_call.1} parent=5 // pred_fallthru
        _
      %p518 = scmp.le.s32.totalorder 2, %s18
      // Predicated region
      $region57: #{tpu_custom_call.1} parent=5 // pred_check
        %p519 = pneg %p518
      $region58: #{tpu_custom_call.1} parent=5 // pred_check_branch
        %521 = sbr.rel (%p519) target = $region60
      $region59: #{tpu_custom_call.1} parent=5 // pred_region
        %s522 = ssub.s32 %s18, 2
        // Predicated region
        $region61: #{tpu_custom_call.1} parent=59 // pred_check
          %p523 = pneg %p157
        $region62: #{tpu_custom_call.1} parent=59 // pred_check_branch
          %525 = sbr.rel (%p523) target = $region64
        $region63: #{tpu_custom_call.1} parent=59 // pred_region
          %s526 = sand.u32 %s142, 1
          %s527 = scalar_lea.sflag [#allocation4], %s526
          %s528 = sand.u32 %s142, 1
          %s529 = smul.addr %s528, 8
          %s530 = scalar_lea.vmem [#allocation8], %s529
          %531 = dma.done %s527, 128
        $region64: #{tpu_custom_call.1} parent=59 // pred_fallthru
          _
      $region60: #{tpu_custom_call.1} parent=5 // pred_fallthru
        _
    $region6: #{tpu_custom_call.1} parent=1 // loop_footer
      %s22 = sadd.s32 1, %s18
    $region7: #{tpu_custom_call.1} parent=1 // loop_footer_branch
      %17 = sbr.rel target = $region3
    $region8: #{tpu_custom_call.1} parent=1 // loop_exit
      _
    %532 = vsyncpa [#allocation3], 1
    %s533 = scalar_lea.sflag [#allocation3], 1
    %534 = vsyncpa %s533, 1
    %535 = vsyncpa [#allocation6], 1
    %536 = vsyncpa [#allocation4], 1
    %s537 = scalar_lea.sflag [#allocation4], 1
    %538 = vsyncpa %s537, 1

</llo_original>
